<compile_context>
chip_gen: v6e
topology: v6e:2x2x1
jax: 0.10.0
libtpu: 0.0.40
codegen_flags: <defaults>
</compile_context>

<pallas_src>
import jax
import jax.numpy as jnp
from jax import lax
from jax.experimental import pallas as pl
from jax.experimental.pallas import tpu as pltpu

LAMBDA_AZ_EL = 0.25
LAMBDA_KL = 0.25
EPS = float(jnp.finfo(jnp.float32).eps)   # torch.finfo(torch.float32).eps

LANE = 128
SUB_ROWS = 512                  # in-kernel compute chunk (rows per VALU pass)
STREAM_BUDGET = 16 << 20        # bytes of double-buffered streaming-input VMEM
NUM_SPLITS = 2                  # leading "parallel" grid axis (2 TCs on v7x)


def _round_up(a, b):
    return ((a + b - 1) // b) * b


def _make_kernel(inv_n_x, valid_rows, tile_r, sub_r):
    """Kernel with the true element count / row bound / tiling baked in."""
    n_sub = tile_r // sub_r

    def kernel(xr_ref, x_ref, mu_ref, lv_ref,
               azp_ref, elp_ref, azt_ref, elt_ref,
               out_ref, acc_ref):
        c = pl.program_id(0)              # core-split axis ("parallel")
        i = pl.program_id(1)              # streaming axis ("arbitrary")
        n_i = pl.num_programs(1)

        @pl.when(i == 0)
        def _init():
            acc_ref[...] = jnp.zeros_like(acc_ref)

        # Logical (unclamped) first row of this block, used for masking.  The
        # index_map clamps the DMA so it always stays in bounds; the mask is
        # applied to dx BEFORE squaring so overhang/duplicated rows contribute
        # exactly zero even if the loaded data is garbage.
        row0 = (c * n_i + i) * tile_r
        local = lax.broadcasted_iota(jnp.int32, (sub_r, LANE), 0)

        # Hot loop: one big DMA tile, processed in small sub-chunks so the
        # elementwise temporaries stay ~256 KiB; pure vld + VALU steady state.
        @pl.loop(0, n_sub)
        def _chunk(j):
            r0 = pl.multiple_of(j * sub_r, sub_r)
            dx = (xr_ref[pl.ds(r0, sub_r), :].astype(jnp.float32)
                  - x_ref[pl.ds(r0, sub_r), :].astype(jnp.float32))
            grow = row0 + j * sub_r + local
            dx = jnp.where(grow < valid_rows, dx, 0.0)
            d2 = dx * dx
            # Fold sublane-groups of 8: vreg-wise adds into the (8,128) acc.
            acc_ref[...] += d2.reshape(sub_r // 8, 8, LANE).sum(axis=0)

        # Finalize: cross-lane reduce + tiny angle/KL terms, once per core.
        @pl.when(i == n_i - 1)
        def _finalize():
            part = jnp.sum(acc_ref[...], keepdims=True) * inv_n_x   # (1,1)

            @pl.when(c == 0)
            def _core0():
                # azimuth: wrap-around angle difference, scale 360
                azp = azp_ref[...].astype(jnp.float32)
                azt = azt_ref[...].astype(jnp.float32)
                ad = jnp.mod(azp - azt, 360.0)
                ad = jnp.minimum(ad, 360.0 - ad) * (1.0 / 360.0)
                mse_az = jnp.sum(ad * ad, keepdims=True) / float(ad.size)

                # elevation: plain MSE on pred/180 vs true/180
                elp = elp_ref[...].astype(jnp.float32)
                elt = elt_ref[...].astype(jnp.float32)
                ed = elp * (1.0 / 180.0) - elt * (1.0 / 180.0)
                mse_el = jnp.sum(ed * ed, keepdims=True) / float(ed.size)

                angle_loss = LAMBDA_AZ_EL * (mse_az + mse_el)

                # KL divergence
                lv = jnp.clip(lv_ref[...].astype(jnp.float32), -20.0, 20.0)
                var = jnp.exp(lv) + EPS
                mu = mu_ref[...].astype(jnp.float32)
                kl_terms = 1.0 + lv - mu * mu - var
                kl = -0.5 * (jnp.sum(kl_terms, keepdims=True)
                             / float(kl_terms.size))

                total = part + angle_loss + LAMBDA_KL * kl
                out_ref[...] = jnp.broadcast_to(total, out_ref.shape)

            @pl.when(c != 0)
            def _other_core():
                out_ref[...] = jnp.broadcast_to(part, out_ref.shape)

    return kernel


def shape_loss(x_reconstructed, x, mu, log_var,
               azimuth_pred, elevation_pred, azimuth_true, elevation_true):
    total = int(x.size)
    assert int(x_reconstructed.size) == total

    isz_xr = x_reconstructed.dtype.itemsize
    isz_x = x.dtype.itemsize
    sublane_min = max(8, 32 // min(isz_xr, isz_x))   # 8 f32, 16 bf16, 32 int8

    # lane-dense slab (rows_p, 128); pad only to lane/sublane granularity
    # (no pad / no HBM copy when the element count is already aligned).
    rows_p = _round_up(pl.cdiv(total, LANE), sublane_min)
    padded = rows_p * LANE

    def _slab(a):
        flat = a.reshape(-1)
        if padded > total:
            flat = jnp.pad(flat, (0, padded - total))
        return flat.reshape(rows_p, LANE)

    xr2 = _slab(x_reconstructed)          # native dtype; f32 cast in-kernel
    x2 = _slab(x)

    # DMA tile: as big as the streaming-buffer budget allows, a multiple of
    # the in-kernel sub-chunk, and never larger than the slab row count (the
    # last block may still overhang; the kernel masks it).
    sub_r = min(SUB_ROWS, rows_p)
    tile_max = max(sub_r,
                   (STREAM_BUDGET // (2 * LANE * (isz_xr + isz_x))
                    // sub_r) * sub_r)
    tile_r = max(sub_r, min(tile_max, (rows_p // sub_r) * sub_r))
    assert tile_r % sub_r == 0 and tile_r % 8 == 0
    n_tiles = pl.cdiv(rows_p, tile_r)
    n_per_split = pl.cdiv(n_tiles, NUM_SPLITS)
    last_block = n_tiles - 1

    def stream_map(c, i):
        # Clamp: a split's trailing blocks may fall entirely past the array;
        # the DMA then just re-reads the last block and the in-kernel row
        # mask zeroes its contribution.
        return (jnp.minimum(c * n_per_split + i, last_block), 0)

    big_spec = pl.BlockSpec((tile_r, LANE), stream_map)

    # tiny resident blocks (constant index_map -> DMA'd once, kept resident)
    mu2 = mu.reshape(1, -1)
    lv2 = log_var.reshape(1, -1)
    azp = azimuth_pred.reshape(1, -1)
    elp = elevation_pred.reshape(1, -1)
    azt = azimuth_true.reshape(1, -1)
    elt = elevation_true.reshape(1, -1)

    def _full(a):
        return pl.BlockSpec(a.shape, lambda c, i: (0,) * a.ndim)

    in_specs = [big_spec, big_spec,
                _full(mu2), _full(lv2),
                _full(azp), _full(elp), _full(azt), _full(elt)]

    stream_bytes = 2 * tile_r * LANE * (isz_xr + isz_x)   # double buffers
    vmem_limit = int(stream_bytes + (8 << 20))            # temps + headroom

    bytes_accessed = (xr2.size * isz_xr + x2.size * isz_x
                      + mu2.size * mu2.dtype.itemsize
                      + lv2.size * lv2.dtype.itemsize
                      + (azp.size + elp.size + azt.size + elt.size)
                      * azp.dtype.itemsize
                      + NUM_SPLITS * 8 * LANE * 4)
    cost = pl.CostEstimate(
        flops=int(3 * padded + 8 * mu2.size + 8 * azp.size),
        transcendentals=int(lv2.size),
        bytes_accessed=int(bytes_accessed),
    )

    out = pl.pallas_call(
        _make_kernel(1.0 / float(total), rows_p, tile_r, sub_r),
        out_shape=jax.ShapeDtypeStruct((NUM_SPLITS * 8, LANE), jnp.float32),
        grid_spec=pltpu.PrefetchScalarGridSpec(
            num_scalar_prefetch=0,
            grid=(NUM_SPLITS, n_per_split),
            in_specs=in_specs,
            out_specs=pl.BlockSpec((8, LANE), lambda c, i: (c, 0)),
            scratch_shapes=[pltpu.VMEM((8, LANE), jnp.float32)],
        ),
        compiler_params=pltpu.CompilerParams(
            dimension_semantics=("parallel", "arbitrary"),
            vmem_limit_bytes=vmem_limit),
        cost_estimate=cost,
    )(xr2, x2, mu2, lv2, azp, elp, azt, elt)

    # One scalar add in the wrapper: slot 0 carries its MSE partial + angle +
    # KL, every other slot carries only its MSE partial.
    result = out[0, 0]
    for k in range(1, NUM_SPLITS):
        result = result + out[k * 8, 0]
    return result


def shape_loss_ref(x_reconstructed, x, mu, log_var,
                   azimuth_pred, elevation_pred, azimuth_true, elevation_true):
    """Pure-JAX reference mirroring the PyTorch forward."""
    f32 = jnp.float32
    xr = x_reconstructed.astype(f32)
    x = x.astype(f32)
    mu = mu.astype(f32)
    lv = log_var.astype(f32)
    mse = jnp.mean((xr - x) ** 2)
    ad = jnp.mod(azimuth_pred.astype(f32) - azimuth_true.astype(f32), 360.0)
    ad = jnp.minimum(ad, 360.0 - ad)
    mse_az = jnp.mean((ad / 360.0) ** 2)
    mse_el = jnp.mean((elevation_pred.astype(f32) / 180.0
                       - elevation_true.astype(f32) / 180.0) ** 2)
    angle = LAMBDA_AZ_EL * (mse_az + mse_el)
    lv = jnp.clip(lv, -20.0, 20.0)
    var = jnp.exp(lv) + EPS
    kl = -0.5 * jnp.mean(1.0 + lv - mu ** 2 - var)
    return mse + angle + LAMBDA_KL * kl


def _run_case(key, shape, latent):
    ks = jax.random.split(key, 8)
    B = shape[0]
    x = jax.random.normal(ks[0], shape, jnp.float32)
    x_rec = x + 0.1 * jax.random.normal(ks[1], shape, jnp.float32)
    mu = jax.random.normal(ks[2], (B, latent), jnp.float32)
    log_var = jax.random.normal(ks[3], (B, latent), jnp.float32)
    az_true = jax.random.uniform(ks[4], (B,), jnp.float32, 0.0, 360.0)
    az_pred = jnp.mod(az_true + 30.0 * jax.random.normal(ks[5], (B,), jnp.float32), 360.0)
    el_true = jax.random.uniform(ks[6], (B,), jnp.float32, 0.0, 180.0)
    el_pred = jnp.clip(el_true + 10.0 * jax.random.normal(ks[7], (B,), jnp.float32),
                       0.0, 180.0)

    out = shape_loss(x_rec, x, mu, log_var, az_pred, el_pred, az_true, el_true)
    out = jax.block_until_ready(out)
    ref = shape_loss_ref(x_rec, x, mu, log_var, az_pred, el_pred, az_true, el_true)
    assert bool(jnp.allclose(out, ref, rtol=1e-4, atol=1e-5)), (out, ref)


if __name__ == "__main__":
    key = jax.random.PRNGKey(0)
    k1, k2, k3 = jax.random.split(key, 3)

    # canonical small case (divides evenly into the 128-lane slab)
    _run_case(k1, (2, 4, 16, 16), 32)
    # ragged case: exercises lane/sublane zero-pad + row-mask + clamped block
    _run_case(k2, (2, 3, 7, 10), 5)
    # slightly larger case: exercises the in-kernel sub-chunk loop and the
    # 2-way core split with a fully masked duplicate block
    _run_case(k3, (2, 4, 128, 128), 32)

    print("KERNEL_OK")
</pallas_src>

<mosaic_0001>
module attributes {stable_mosaic.version = 11 : i64} {
  func.func @kernel(%arg0: i32, %arg1: i32, %arg2: memref<16x128xf32, #tpu.memory_space<vmem>>, %arg3: memref<16x128xf32, #tpu.memory_space<vmem>>, %arg4: memref<1x64xf32, #tpu.memory_space<vmem>>, %arg5: memref<1x64xf32, #tpu.memory_space<vmem>>, %arg6: memref<1x2xf32, #tpu.memory_space<vmem>>, %arg7: memref<1x2xf32, #tpu.memory_space<vmem>>, %arg8: memref<1x2xf32, #tpu.memory_space<vmem>>, %arg9: memref<1x2xf32, #tpu.memory_space<vmem>>, %arg10: memref<8x128xf32, #tpu.memory_space<vmem>>, %arg11: memref<8x128xf32, #tpu.memory_space<vmem>>) attributes {dimension_semantics = [#tpu.dimension_semantics<parallel>, #tpu.dimension_semantics<arbitrary>], iteration_bounds = array<i64: 2, 1>, scalar_prefetch = 0 : i64, scratch_operands = 1 : i64, tpu.core_type = #tpu.core_type<tc>, window_params = [{transform_indices = @transform_0, window_bounds = array<i64: 16, 128>}, {transform_indices = @transform_1, window_bounds = array<i64: 16, 128>}, {pipeline_mode = #tpu.pipeline_mode<synchronous>, transform_indices = @transform_2, window_bounds = array<i64: 1, 64>}, {pipeline_mode = #tpu.pipeline_mode<synchronous>, transform_indices = @transform_3, window_bounds = array<i64: 1, 64>}, {pipeline_mode = #tpu.pipeline_mode<synchronous>, transform_indices = @transform_4, window_bounds = array<i64: 1, 2>}, {pipeline_mode = #tpu.pipeline_mode<synchronous>, transform_indices = @transform_5, window_bounds = array<i64: 1, 2>}, {pipeline_mode = #tpu.pipeline_mode<synchronous>, transform_indices = @transform_6, window_bounds = array<i64: 1, 2>}, {pipeline_mode = #tpu.pipeline_mode<synchronous>, transform_indices = @transform_7, window_bounds = array<i64: 1, 2>}, {transform_indices = @transform_8, window_bounds = array<i64: 8, 128>}]} {
    %c0_i32 = arith.constant 0 : i32
    %0 = arith.cmpi eq, %arg1, %c0_i32 : i32
    %1 = arith.extui %0 : i1 to i32
    %c0_i32_0 = arith.constant 0 : i32
    %2 = arith.cmpi ne, %1, %c0_i32_0 : i32
    scf.if %2 {
      %cst_16 = arith.constant 0.000000e+00 : f32
      %33 = vector.broadcast %cst_16 : f32 to vector<8x128xf32>
      %c0_17 = arith.constant 0 : index
      %c0_18 = arith.constant 0 : index
      %34 = vector.load %arg11[%c0_17, %c0_18] : memref<8x128xf32, #tpu.memory_space<vmem>>, vector<8x128xf32>
      tpu.vector_store %arg11[%c0_17, %c0_18], %33 {strides = array<i32>} : memref<8x128xf32, #tpu.memory_space<vmem>>, vector<8x128xf32>,
    } else {
    }
    %c1_i32 = arith.constant 1 : i32
    %3 = arith.muli %arg0, %c1_i32 : i32
    %4 = arith.addi %3, %arg1 : i32
    %c16_i32 = arith.constant 16 : i32
    %5 = arith.muli %4, %c16_i32 : i32
    %6 = tpu.iota {dimensions = array<i32: 0>} : vector<16x128xi32>
    %c0_i32_1 = arith.constant 0 : i32
    %c1_i32_2 = arith.constant 1 : i32
    %7 = arith.muli %c0_i32_1, %c1_i32_2 : i32
    %c0_i32_3 = arith.constant 0 : i32
    %8 = arith.addi %c0_i32_3, %7 : i32
    %c16_i32_4 = arith.constant 16 : i32
    %9 = arith.muli %8, %c16_i32_4 : i32
    %10 = tpu.assume_multiple %9, 16 : i32
    %11 = arith.index_cast %10 : i32 to index
    %c0 = arith.constant 0 : index
    %12 = vector.load %arg2[%11, %c0] : memref<16x128xf32, #tpu.memory_space<vmem>>, vector<16x128xf32>
    %13 = arith.index_cast %10 : i32 to index
    %c0_5 = arith.constant 0 : index
    %14 = vector.load %arg3[%13, %c0_5] : memref<16x128xf32, #tpu.memory_space<vmem>>, vector<16x128xf32>
    %15 = arith.subf %12, %14 : vector<16x128xf32>
    %c16_i32_6 = arith.constant 16 : i32
    %16 = arith.muli %8, %c16_i32_6 : i32
    %17 = arith.addi %5, %16 : i32
    %18 = vector.broadcast %17 : i32 to vector<16x128xi32>
    %19 = arith.addi %18, %6 : vector<16x128xi32>
    %c16_i32_7 = arith.constant 16 : i32
    %20 = vector.broadcast %c16_i32_7 : i32 to vector<16x128xi32>
    %21 = arith.cmpi slt, %19, %20 : vector<16x128xi32>
    %cst = arith.constant 0.000000e+00 : f32
    %22 = vector.broadcast %cst : f32 to vector<16x128xf32>
    %23 = arith.select %21, %15, %22 : vector<16x128xi1>, vector<16x128xf32>
    %24 = arith.mulf %23, %23 : vector<16x128xf32>
    %c0_8 = arith.constant 0 : index
    %c0_9 = arith.constant 0 : index
    %25 = vector.load %arg11[%c0_8, %c0_9] : memref<8x128xf32, #tpu.memory_space<vmem>>, vector<8x128xf32>
    %26 = vector.shape_cast %24 : vector<16x128xf32> to vector<2x8x128xf32>
    %cst_10 = arith.constant dense<0.000000e+00> : vector<8x128xf32>
    %27 = vector.multi_reduction <add>, %26, %cst_10 [0] : vector<2x8x128xf32> to vector<8x128xf32>
    %28 = arith.addf %25, %27 : vector<8x128xf32>
    %c0_11 = arith.constant 0 : index
    %c0_12 = arith.constant 0 : index
    %29 = vector.load %arg11[%c0_11, %c0_12] : memref<8x128xf32, #tpu.memory_space<vmem>>, vector<8x128xf32>
    tpu.vector_store %arg11[%c0_11, %c0_12], %28 {strides = array<i32>} : memref<8x128xf32, #tpu.memory_space<vmem>>, vector<8x128xf32>,
    %c1_i32_13 = arith.constant 1 : i32
    %c0_i32_14 = arith.constant 0 : i32
    %30 = arith.cmpi eq, %arg1, %c0_i32_14 : i32
    %31 = arith.extui %30 : i1 to i32
    %c0_i32_15 = arith.constant 0 : i32
    %32 = arith.cmpi ne, %31, %c0_i32_15 : i32
    scf.if %32 {
      %c0_16 = arith.constant 0 : index
      %c0_17 = arith.constant 0 : index
      %33 = vector.load %arg11[%c0_16, %c0_17] : memref<8x128xf32, #tpu.memory_space<vmem>>, vector<8x128xf32>
      %34 = vector.shape_cast %33 : vector<8x128xf32> to vector<1x8x128xf32>
      %cst_18 = arith.constant dense<0.000000e+00> : vector<1xf32>
      %35 = vector.multi_reduction <add>, %34, %cst_18 [1, 2] : vector<1x8x128xf32> to vector<1xf32>
      %36 = vector.shape_cast %35 : vector<1xf32> to vector<1x1x1xf32>
      %37 = vector.extract %36[0, 0, 0] : f32 from vector<1x1x1xf32>
      %38 = vector.broadcast %37 : f32 to vector<1x1xf32>
      %cst_19 = arith.constant 4.8828125E-4 : f32
      %39 = vector.broadcast %cst_19 : f32 to vector<1x1xf32>
      %40 = arith.mulf %38, %39 : vector<1x1xf32>
      %c0_i32_20 = arith.constant 0 : i32
      %41 = arith.cmpi eq, %arg0, %c0_i32_20 : i32
      %42 = arith.extui %41 : i1 to i32
      %c0_i32_21 = arith.constant 0 : i32
      %43 = arith.cmpi ne, %42, %c0_i32_21 : i32
      scf.if %43 {
        %c0_24 = arith.constant 0 : index
        %c0_25 = arith.constant 0 : index
        %47 = vector.load %arg6[%c0_24, %c0_25] : memref<1x2xf32, #tpu.memory_space<vmem>>, vector<1x2xf32>
        %c0_26 = arith.constant 0 : index
        %c0_27 = arith.constant 0 : index
        %48 = vector.load %arg8[%c0_26, %c0_27] : memref<1x2xf32, #tpu.memory_space<vmem>>, vector<1x2xf32>
        %49 = arith.subf %47, %48 : vector<1x2xf32>
        %cst_28 = arith.constant 3.600000e+02 : f32
        %50 = vector.broadcast %cst_28 : f32 to vector<1x2xf32>
        %51 = arith.remf %49, %50 : vector<1x2xf32>
        %cst_29 = arith.constant 0.000000e+00 : f32
        %52 = vector.broadcast %cst_29 : f32 to vector<1x2xf32>
        %53 = arith.cmpf one, %51, %52 : vector<1x2xf32>
        %cst_30 = arith.constant 0.000000e+00 : f32
        %54 = vector.broadcast %cst_30 : f32 to vector<1x2xf32>
        %55 = arith.cmpf olt, %51, %54 : vector<1x2xf32>
        %cst_31 = arith.constant 0.000000e+00 : f32
        %56 = arith.cmpf olt, %cst_28, %cst_31 : f32
        %57 = vector.broadcast %56 : i1 to vector<1x2xi1>
        %58 = vector.broadcast %57 : vector<1x2xi1> to vector<1x2xi1>
        %59 = arith.xori %55, %58 : vector<1x2xi1>
        %60 = arith.andi %59, %53 : vector<1x2xi1>
        %61 = vector.broadcast %cst_28 : f32 to vector<1x2xf32>
        %62 = arith.addf %51, %61 : vector<1x2xf32>
        %63 = arith.select %60, %62, %51 : vector<1x2xi1>, vector<1x2xf32>
        %cst_32 = arith.constant 3.600000e+02 : f32
        %64 = vector.broadcast %cst_32 : f32 to vector<1x2xf32>
        %65 = arith.subf %64, %63 : vector<1x2xf32>
        %66 = arith.minimumf %63, %65 : vector<1x2xf32>
        %cst_33 = arith.constant 0.00277777785 : f32
        %67 = vector.broadcast %cst_33 : f32 to vector<1x2xf32>
        %68 = arith.mulf %66, %67 : vector<1x2xf32>
        %69 = arith.mulf %68, %68 : vector<1x2xf32>
        %70 = vector.shape_cast %69 : vector<1x2xf32> to vector<1x1x2xf32>
        %cst_34 = arith.constant dense<0.000000e+00> : vector<1xf32>
        %71 = vector.multi_reduction <add>, %70, %cst_34 [1, 2] : vector<1x1x2xf32> to vector<1xf32>
        %72 = vector.shape_cast %71 : vector<1xf32> to vector<1x1x1xf32>
        %73 = vector.extract %72[0, 0, 0] : f32 from vector<1x1x1xf32>
        %74 = vector.broadcast %73 : f32 to vector<1x1xf32>
        %cst_35 = arith.constant 2.000000e+00 : f32
        %75 = vector.broadcast %cst_35 : f32 to vector<1x1xf32>
        %76 = arith.divf %74, %75 : vector<1x1xf32>
        %c0_36 = arith.constant 0 : index
        %c0_37 = arith.constant 0 : index
        %77 = vector.load %arg7[%c0_36, %c0_37] : memref<1x2xf32, #tpu.memory_space<vmem>>, vector<1x2xf32>
        %c0_38 = arith.constant 0 : index
        %c0_39 = arith.constant 0 : index
        %78 = vector.load %arg9[%c0_38, %c0_39] : memref<1x2xf32, #tpu.memory_space<vmem>>, vector<1x2xf32>
        %cst_40 = arith.constant 0.00555555569 : f32
        %79 = vector.broadcast %cst_40 : f32 to vector<1x2xf32>
        %80 = arith.mulf %77, %79 : vector<1x2xf32>
        %cst_41 = arith.constant 0.00555555569 : f32
        %81 = vector.broadcast %cst_41 : f32 to vector<1x2xf32>
        %82 = arith.mulf %78, %81 : vector<1x2xf32>
        %83 = arith.subf %80, %82 : vector<1x2xf32>
        %84 = arith.mulf %83, %83 : vector<1x2xf32>
        %85 = vector.shape_cast %84 : vector<1x2xf32> to vector<1x1x2xf32>
        %cst_42 = arith.constant dense<0.000000e+00> : vector<1xf32>
        %86 = vector.multi_reduction <add>, %85, %cst_42 [1, 2] : vector<1x1x2xf32> to vector<1xf32>
        %87 = vector.shape_cast %86 : vector<1xf32> to vector<1x1x1xf32>
        %88 = vector.extract %87[0, 0, 0] : f32 from vector<1x1x1xf32>
        %89 = vector.broadcast %88 : f32 to vector<1x1xf32>
        %cst_43 = arith.constant 2.000000e+00 : f32
        %90 = vector.broadcast %cst_43 : f32 to vector<1x1xf32>
        %91 = arith.divf %89, %90 : vector<1x1xf32>
        %92 = arith.addf %76, %91 : vector<1x1xf32>
        %cst_44 = arith.constant 2.500000e-01 : f32
        %93 = vector.broadcast %cst_44 : f32 to vector<1x1xf32>
        %94 = arith.mulf %93, %92 : vector<1x1xf32>
        %c0_45 = arith.constant 0 : index
        %c0_46 = arith.constant 0 : index
        %95 = vector.load %arg5[%c0_45, %c0_46] : memref<1x64xf32, #tpu.memory_space<vmem>>, vector<1x64xf32>
        %cst_47 = arith.constant -2.000000e+01 : f32
        %cst_48 = arith.constant 2.000000e+01 : f32
        %96 = vector.broadcast %cst_47 : f32 to vector<1x64xf32>
        %97 = arith.maximumf %96, %95 : vector<1x64xf32>
        %98 = vector.broadcast %cst_48 : f32 to vector<1x64xf32>
        %99 = arith.minimumf %98, %97 : vector<1x64xf32>
        %100 = math.exp %99 : vector<1x64xf32>
        %cst_49 = arith.constant 1.1920929E-7 : f32
        %101 = vector.broadcast %cst_49 : f32 to vector<1x64xf32>
        %102 = arith.addf %100, %101 : vector<1x64xf32>
        %c0_50 = arith.constant 0 : index
        %c0_51 = arith.constant 0 : index
        %103 = vector.load %arg4[%c0_50, %c0_51] : memref<1x64xf32, #tpu.memory_space<vmem>>, vector<1x64xf32>
        %cst_52 = arith.constant 1.000000e+00 : f32
        %104 = vector.broadcast %cst_52 : f32 to vector<1x64xf32>
        %105 = arith.addf %104, %99 : vector<1x64xf32>
        %106 = arith.mulf %103, %103 : vector<1x64xf32>
        %107 = arith.subf %105, %106 : vector<1x64xf32>
        %108 = arith.subf %107, %102 : vector<1x64xf32>
        %109 = vector.shape_cast %108 : vector<1x64xf32> to vector<1x1x64xf32>
        %cst_53 = arith.constant dense<0.000000e+00> : vector<1xf32>
        %110 = vector.multi_reduction <add>, %109, %cst_53 [1, 2] : vector<1x1x64xf32> to vector<1xf32>
        %111 = vector.shape_cast %110 : vector<1xf32> to vector<1x1x1xf32>
        %112 = vector.extract %111[0, 0, 0] : f32 from vector<1x1x1xf32>
        %113 = vector.broadcast %112 : f32 to vector<1x1xf32>
        %cst_54 = arith.constant 6.400000e+01 : f32
        %114 = vector.broadcast %cst_54 : f32 to vector<1x1xf32>
        %115 = arith.divf %113, %114 : vector<1x1xf32>
        %cst_55 = arith.constant -5.000000e-01 : f32
        %116 = vector.broadcast %cst_55 : f32 to vector<1x1xf32>
        %117 = arith.mulf %116, %115 : vector<1x1xf32>
        %118 = arith.addf %40, %94 : vector<1x1xf32>
        %cst_56 = arith.constant 2.500000e-01 : f32
        %119 = vector.broadcast %cst_56 : f32 to vector<1x1xf32>
        %120 = arith.mulf %119, %117 : vector<1x1xf32>
        %121 = arith.addf %118, %120 : vector<1x1xf32>
        %122 = vector.shape_cast %121 : vector<1x1xf32> to vector<1x1xf32>
        %123 = vector.broadcast %122 : vector<1x1xf32> to vector<8x128xf32>
        %c0_57 = arith.constant 0 : index
        %c0_58 = arith.constant 0 : index
        %124 = vector.load %arg10[%c0_57, %c0_58] : memref<8x128xf32, #tpu.memory_space<vmem>>, vector<8x128xf32>
        tpu.vector_store %arg10[%c0_57, %c0_58], %123 {strides = array<i32>} : memref<8x128xf32, #tpu.memory_space<vmem>>, vector<8x128xf32>,
      } else {
      }
      %c0_i32_22 = arith.constant 0 : i32
      %44 = arith.cmpi ne, %arg0, %c0_i32_22 : i32
      %45 = arith.extui %44 : i1 to i32
      %c0_i32_23 = arith.constant 0 : i32
      %46 = arith.cmpi ne, %45, %c0_i32_23 : i32
      scf.if %46 {
        %47 = vector.shape_cast %40 : vector<1x1xf32> to vector<1x1xf32>
        %48 = vector.broadcast %47 : vector<1x1xf32> to vector<8x128xf32>
        %c0_24 = arith.constant 0 : index
        %c0_25 = arith.constant 0 : index
        %49 = vector.load %arg10[%c0_24, %c0_25] : memref<8x128xf32, #tpu.memory_space<vmem>>, vector<8x128xf32>
        tpu.vector_store %arg10[%c0_24, %c0_25], %48 {strides = array<i32>} : memref<8x128xf32, #tpu.memory_space<vmem>>, vector<8x128xf32>,
      } else {
      }
    } else {
    }
    return
  }
  func.func @transform_0(%arg0: i32, %arg1: i32) -> (i32, i32) {
    %c1_i32 = arith.constant 1 : i32
    %0 = arith.muli %arg0, %c1_i32 : i32
    %1 = arith.addi %0, %arg1 : i32
    %c0_i32 = arith.constant 0 : i32
    %2 = arith.minsi %1, %c0_i32 : i32
    %c0_i32_0 = arith.constant 0 : i32
    %c0_i32_1 = arith.constant 0 : i32
    return %2, %c0_i32_0 : i32, i32
  }
  func.func @transform_1(%arg0: i32, %arg1: i32) -> (i32, i32) {
    %c1_i32 = arith.constant 1 : i32
    %0 = arith.muli %arg0, %c1_i32 : i32
    %1 = arith.addi %0, %arg1 : i32
    %c0_i32 = arith.constant 0 : i32
    %2 = arith.minsi %1, %c0_i32 : i32
    %c0_i32_0 = arith.constant 0 : i32
    %c0_i32_1 = arith.constant 0 : i32
    return %2, %c0_i32_0 : i32, i32
  }
  func.func @transform_2(%arg0: i32, %arg1: i32) -> (i32, i32) {
    %c0_i32 = arith.constant 0 : i32
    %c0_i32_0 = arith.constant 0 : i32
    %c0_i32_1 = arith.constant 0 : i32
    return %c0_i32, %c0_i32_0 : i32, i32
  }
  func.func @transform_3(%arg0: i32, %arg1: i32) -> (i32, i32) {
    %c0_i32 = arith.constant 0 : i32
    %c0_i32_0 = arith.constant 0 : i32
    %c0_i32_1 = arith.constant 0 : i32
    return %c0_i32, %c0_i32_0 : i32, i32
  }
  func.func @transform_4(%arg0: i32, %arg1: i32) -> (i32, i32) {
    %c0_i32 = arith.constant 0 : i32
    %c0_i32_0 = arith.constant 0 : i32
    %c0_i32_1 = arith.constant 0 : i32
    return %c0_i32, %c0_i32_0 : i32, i32
  }
  func.func @transform_5(%arg0: i32, %arg1: i32) -> (i32, i32) {
    %c0_i32 = arith.constant 0 : i32
    %c0_i32_0 = arith.constant 0 : i32
    %c0_i32_1 = arith.constant 0 : i32
    return %c0_i32, %c0_i32_0 : i32, i32
  }
  func.func @transform_6(%arg0: i32, %arg1: i32) -> (i32, i32) {
    %c0_i32 = arith.constant 0 : i32
    %c0_i32_0 = arith.constant 0 : i32
    %c0_i32_1 = arith.constant 0 : i32
    return %c0_i32, %c0_i32_0 : i32, i32
  }
  func.func @transform_7(%arg0: i32, %arg1: i32) -> (i32, i32) {
    %c0_i32 = arith.constant 0 : i32
    %c0_i32_0 = arith.constant 0 : i32
    %c0_i32_1 = arith.constant 0 : i32
    return %c0_i32, %c0_i32_0 : i32, i32
  }
  func.func @transform_8(%arg0: i32, %arg1: i32) -> (i32, i32) {
    %c0_i32 = arith.constant 0 : i32
    %c0_i32_0 = arith.constant 0 : i32
    return %arg0, %c0_i32 : i32, i32
  }
}

</mosaic_0001>

<llo_original>
// kernel: tpu_custom_call.1
$region0: #{tpu_custom_call.1}
  #allocation0 [shape = 'u32[]', space=smem, size = 0x4, offset = 0x4, fixed_abs, tag = 'smem constant byte address 0x4 - core index']
  #allocation1 [shape = 'u32[144,128]{1,0:T(1,128)}', space=vmem, size = 0x12000, scoped, tag = 'internal scratch']
  #allocation2 [shape = 'f32[8,128]{1,0:T(8,128)}', space=vmem, size = 0x1000, scoped, tag = 'scratch operand']
  %s0 = inlined_call_operand.hbm [shape: f32[16,128], index: 0, kind: input, shape index: {}]
  %s1 = inlined_call_operand.hbm [shape: f32[16,128], index: 1, kind: input, shape index: {}]
  %s2 = inlined_call_operand.vmem [shape: f32[1,64], index: 2, kind: input, shape index: {}]
  %s3 = inlined_call_operand.vmem [shape: f32[1,64], index: 3, kind: input, shape index: {}]
  %s4 = inlined_call_operand.vmem [shape: f32[1,2], index: 4, kind: input, shape index: {}]
  %s5 = inlined_call_operand.vmem [shape: f32[1,2], index: 5, kind: input, shape index: {}]
  %s6 = inlined_call_operand.vmem [shape: f32[1,2], index: 6, kind: input, shape index: {}]
  %s7 = inlined_call_operand.vmem [shape: f32[1,2], index: 7, kind: input, shape index: {}]
  %s8 = inlined_call_operand.hbm [shape: f32[16,128], index: 8, kind: output, shape index: {}]
  %s9 = sld [smem:[#allocation0]]
  $region89: #{tpu_custom_call.1} parent=0
    _
  %s11 = ssub.s32 1, %s9
  %s12 = scalar_select 0, %s11, %s9
  $region1: #{tpu_custom_call.1} parent=0
    #allocation3 [shape = 'u8[16384]{0}', space=vmem, size = 0x4000, scoped, tag = 'input window, operand 0']
    #allocation4 [shape = 's32[2]{0}', space=sflag, size = 0x8, scoped, tag = 'scoped memory for tpu_custom_call.1']
    #allocation5 [shape = 's32[2]{0}', space=sflag, size = 0x8, scoped, tag = 'scoped memory for tpu_custom_call.1']
    #allocation6 [shape = 'u8[16384]{0}', space=vmem, size = 0x4000, scoped, tag = 'input window, operand 1']
    #allocation7 [shape = 's32[2]{0}', space=sflag, size = 0x8, scoped, tag = 'scoped memory for tpu_custom_call.1']
    #allocation8 [shape = 'u8[8192]{0}', space=vmem, size = 0x2000, scoped, tag = 'output window, operand 0']
    %13 = vsyncpa [#allocation4], 0
    %s14 = scalar_lea.sflag [#allocation4], 1
    %15 = vsyncpa %s14, 0
    %16 = vsyncpa [#allocation7], 0
    %s17 = scalar_lea.sflag [#allocation7], 1
    %18 = vsyncpa %s17, 0
    %19 = vsyncpa [#allocation5], 0
    %s20 = scalar_lea.sflag [#allocation5], 1
    %21 = vsyncpa %s20, 0
    loop: start=0, step=1, limit=4
    $region2: #{tpu_custom_call.1} parent=1 // loop_pre_header
      _
    $region3: #{tpu_custom_call.1} parent=1 // loop_header
      %s23 = sphi 0, %s27
      %p24 = scmp.ge.s32.totalorder %s23, 4
      %s30 = sphi 0, %s42
      %s31 = sphi 0, %s38
      %s32 = sphi 0, %s30
      %s33 = sphi 0, %s31
      %s34 = sphi 0, %s32
      %s35 = sphi 0, %s33
      %s51 = sphi 0, %s53
      %s54 = sphi 0, %s51
      %s55 = sphi 0, %s54
      %s71 = sphi 0, %s55
      %s83 = sphi 0, %s85
      %s86 = sphi 0, %s83
      %s87 = sphi 0, %s86
      %s103 = sphi 0, %s87
      %s107 = sphi 0, %s107
      %s109 = sphi 0, %s107
      %s110 = sphi 0, %s109
      %s124 = sphi 0, %s110
      %s128 = sphi 0, %s128
      %s130 = sphi 0, %s128
      %s131 = sphi 0, %s130
      %s145 = sphi 0, %s131
      %s149 = sphi 0, %s149
      %s151 = sphi 0, %s149
      %s152 = sphi 0, %s151
      %s166 = sphi 0, %s152
      %s170 = sphi 0, %s170
      %s172 = sphi 0, %s170
      %s173 = sphi 0, %s172
      %s187 = sphi 0, %s173
      %s191 = sphi 0, %s191
      %s193 = sphi 0, %s191
      %s194 = sphi 0, %s193
      %s208 = sphi 0, %s194
      %s212 = sphi 0, %s212
      %s214 = sphi 0, %s212
      %s215 = sphi 0, %s214
      %s229 = sphi 0, %s215
      %s235 = sphi 0, %s237
      %s238 = sphi 0, %s235
      %s239 = sphi 0, %s238
      %s255 = sphi 0, %s239
    $region4: #{tpu_custom_call.1} parent=1 // loop_header_branch
      %26 = sbr.rel (%p24) target = $region8
    $region5: #{tpu_custom_call.1} parent=1 // loop_body
      %s28 = ssub.s32 %s23, 1
      %s29 = ssub.s32 %s23, 2
      %s36 = sadd.s32 1, %s31
      %p37 = scmp.ge.s32.totalorder %s36, 1
      %s38 = scalar_select %p37, 0, %s36
      %s39 = sadd.s32 1, %s30
      %s40 = scalar_select %p37, %s39, %s30
      %p41 = scmp.ge.s32.totalorder %s40, 2
      %s42 = scalar_select %p41, 0, %s40
      %s43 = sadd.s32 %s30, %s31
      %p44 = scmp.lt.s32.totalorder %s43, 0
      %s45 = scalar_select %p44, %s43, 0
      %s46 = sadd.s32 %s42, %s38
      %p47 = scmp.lt.s32.totalorder %s46, 0
      %s48 = scalar_select %p47, %s46, 0
      %s49 = ssub.s32 %s45, %s48
      %p50 = scmp.eq.s32.totalorder %s49, 0
      %s52 = sadd.s32 %s51, 1
      %s53 = scalar_select %p50, %s51, %s52
      %p56 = pneg %p50
      %p57 = scmp.eq.s32.totalorder %s23, 1
      %p58 = por %p56, %p57
      %p59 = scmp.ne.s32.totalorder %s51, %s54
      %p60 = scmp.eq.s32.totalorder %s23, 0
      %p61 = por %p59, %p60
      %p62 = scmp.ne.s32.totalorder %s51, %s54
      %p63 = scmp.eq.s32.totalorder %s28, 1
      %p64 = por %p62, %p63
      %p65 = scmp.ne.s32.totalorder %s54, %s55
      %p66 = scmp.eq.s32.totalorder %s28, 0
      %p67 = por %p65, %p66
      %p68 = scmp.ne.s32.totalorder %s54, %s55
      %p69 = scmp.eq.s32.totalorder %s29, 1
      %p70 = por %p68, %p69
      %p72 = scmp.ne.s32.totalorder %s55, %s71
      %p73 = scmp.eq.s32.totalorder %s29, 0
      %p74 = por %p72, %p73
      %s75 = sadd.s32 %s30, %s31
      %p76 = scmp.lt.s32.totalorder %s75, 0
      %s77 = scalar_select %p76, %s75, 0
      %s78 = sadd.s32 %s42, %s38
      %p79 = scmp.lt.s32.totalorder %s78, 0
      %s80 = scalar_select %p79, %s78, 0
      %s81 = ssub.s32 %s77, %s80
      %p82 = scmp.eq.s32.totalorder %s81, 0
      %s84 = sadd.s32 %s83, 1
      %s85 = scalar_select %p82, %s83, %s84
      %p88 = pneg %p82
      %p89 = scmp.eq.s32.totalorder %s23, 1
      %p90 = por %p88, %p89
      %p91 = scmp.ne.s32.totalorder %s83, %s86
      %p92 = scmp.eq.s32.totalorder %s23, 0
      %p93 = por %p91, %p92
      %p94 = scmp.ne.s32.totalorder %s83, %s86
      %p95 = scmp.eq.s32.totalorder %s28, 1
      %p96 = por %p94, %p95
      %p97 = scmp.ne.s32.totalorder %s86, %s87
      %p98 = scmp.eq.s32.totalorder %s28, 0
      %p99 = por %p97, %p98
      %p100 = scmp.ne.s32.totalorder %s86, %s87
      %p101 = scmp.eq.s32.totalorder %s29, 1
      %p102 = por %p100, %p101
      %p104 = scmp.ne.s32.totalorder %s87, %s103
      %p105 = scmp.eq.s32.totalorder %s29, 0
      %p106 = por %p104, %p105
      %s108 = sadd.s32 %s107, 1
      %p111 = scmp.eq.s32.totalorder %s23, 1
      %p112 = scmp.ne.s32.totalorder %s107, %s109
      %p113 = scmp.eq.s32.totalorder %s23, 0
      %p114 = por %p112, %p113
      %p115 = scmp.ne.s32.totalorder %s107, %s109
      %p116 = scmp.eq.s32.totalorder %s28, 1
      %p117 = por %p115, %p116
      %p118 = scmp.ne.s32.totalorder %s109, %s110
      %p119 = scmp.eq.s32.totalorder %s28, 0
      %p120 = por %p118, %p119
      %p121 = scmp.ne.s32.totalorder %s109, %s110
      %p122 = scmp.eq.s32.totalorder %s29, 1
      %p123 = por %p121, %p122
      %p125 = scmp.ne.s32.totalorder %s110, %s124
      %p126 = scmp.eq.s32.totalorder %s29, 0
      %p127 = por %p125, %p126
      %s129 = sadd.s32 %s128, 1
      %p132 = scmp.eq.s32.totalorder %s23, 1
      %p133 = scmp.ne.s32.totalorder %s128, %s130
      %p134 = scmp.eq.s32.totalorder %s23, 0
      %p135 = por %p133, %p134
      %p136 = scmp.ne.s32.totalorder %s128, %s130
      %p137 = scmp.eq.s32.totalorder %s28, 1
      %p138 = por %p136, %p137
      %p139 = scmp.ne.s32.totalorder %s130, %s131
      %p140 = scmp.eq.s32.totalorder %s28, 0
      %p141 = por %p139, %p140
      %p142 = scmp.ne.s32.totalorder %s130, %s131
      %p143 = scmp.eq.s32.totalorder %s29, 1
      %p144 = por %p142, %p143
      %p146 = scmp.ne.s32.totalorder %s131, %s145
      %p147 = scmp.eq.s32.totalorder %s29, 0
      %p148 = por %p146, %p147
      %s150 = sadd.s32 %s149, 1
      %p153 = scmp.eq.s32.totalorder %s23, 1
      %p154 = scmp.ne.s32.totalorder %s149, %s151
      %p155 = scmp.eq.s32.totalorder %s23, 0
      %p156 = por %p154, %p155
      %p157 = scmp.ne.s32.totalorder %s149, %s151
      %p158 = scmp.eq.s32.totalorder %s28, 1
      %p159 = por %p157, %p158
      %p160 = scmp.ne.s32.totalorder %s151, %s152
      %p161 = scmp.eq.s32.totalorder %s28, 0
      %p162 = por %p160, %p161
      %p163 = scmp.ne.s32.totalorder %s151, %s152
      %p164 = scmp.eq.s32.totalorder %s29, 1
      %p165 = por %p163, %p164
      %p167 = scmp.ne.s32.totalorder %s152, %s166
      %p168 = scmp.eq.s32.totalorder %s29, 0
      %p169 = por %p167, %p168
      %s171 = sadd.s32 %s170, 1
      %p174 = scmp.eq.s32.totalorder %s23, 1
      %p175 = scmp.ne.s32.totalorder %s170, %s172
      %p176 = scmp.eq.s32.totalorder %s23, 0
      %p177 = por %p175, %p176
      %p178 = scmp.ne.s32.totalorder %s170, %s172
      %p179 = scmp.eq.s32.totalorder %s28, 1
      %p180 = por %p178, %p179
      %p181 = scmp.ne.s32.totalorder %s172, %s173
      %p182 = scmp.eq.s32.totalorder %s28, 0
      %p183 = por %p181, %p182
      %p184 = scmp.ne.s32.totalorder %s172, %s173
      %p185 = scmp.eq.s32.totalorder %s29, 1
      %p186 = por %p184, %p185
      %p188 = scmp.ne.s32.totalorder %s173, %s187
      %p189 = scmp.eq.s32.totalorder %s29, 0
      %p190 = por %p188, %p189
      %s192 = sadd.s32 %s191, 1
      %p195 = scmp.eq.s32.totalorder %s23, 1
      %p196 = scmp.ne.s32.totalorder %s191, %s193
      %p197 = scmp.eq.s32.totalorder %s23, 0
      %p198 = por %p196, %p197
      %p199 = scmp.ne.s32.totalorder %s191, %s193
      %p200 = scmp.eq.s32.totalorder %s28, 1
      %p201 = por %p199, %p200
      %p202 = scmp.ne.s32.totalorder %s193, %s194
      %p203 = scmp.eq.s32.totalorder %s28, 0
      %p204 = por %p202, %p203
      %p205 = scmp.ne.s32.totalorder %s193, %s194
      %p206 = scmp.eq.s32.totalorder %s29, 1
      %p207 = por %p205, %p206
      %p209 = scmp.ne.s32.totalorder %s194, %s208
      %p210 = scmp.eq.s32.totalorder %s29, 0
      %p211 = por %p209, %p210
      %s213 = sadd.s32 %s212, 1
      %p216 = scmp.eq.s32.totalorder %s23, 1
      %p217 = scmp.ne.s32.totalorder %s212, %s214
      %p218 = scmp.eq.s32.totalorder %s23, 0
      %p219 = por %p217, %p218
      %p220 = scmp.ne.s32.totalorder %s212, %s214
      %p221 = scmp.eq.s32.totalorder %s28, 1
      %p222 = por %p220, %p221
      %p223 = scmp.ne.s32.totalorder %s214, %s215
      %p224 = scmp.eq.s32.totalorder %s28, 0
      %p225 = por %p223, %p224
      %p226 = scmp.ne.s32.totalorder %s214, %s215
      %p227 = scmp.eq.s32.totalorder %s29, 1
      %p228 = por %p226, %p227
      %p230 = scmp.ne.s32.totalorder %s215, %s229
      %p231 = scmp.eq.s32.totalorder %s29, 0
      %p232 = por %p230, %p231
      %s233 = ssub.s32 %s30, %s42
      %p234 = scmp.eq.s32.totalorder %s233, 0
      %s236 = sadd.s32 %s235, 1
      %s237 = scalar_select %p234, %s235, %s236
      %p240 = pneg %p234
      %p241 = scmp.eq.s32.totalorder %s23, 1
      %p242 = por %p240, %p241
      %p243 = scmp.ne.s32.totalorder %s235, %s238
      %p244 = scmp.eq.s32.totalorder %s23, 0
      %p245 = por %p243, %p244
      %p246 = scmp.ne.s32.totalorder %s235, %s238
      %p247 = scmp.eq.s32.totalorder %s28, 1
      %p248 = por %p246, %p247
      %p249 = scmp.ne.s32.totalorder %s238, %s239
      %p250 = scmp.eq.s32.totalorder %s28, 0
      %p251 = por %p249, %p250
      %p252 = scmp.ne.s32.totalorder %s238, %s239
      %p253 = scmp.eq.s32.totalorder %s29, 1
      %p254 = por %p252, %p253
      %p256 = scmp.ne.s32.totalorder %s239, %s255
      %p257 = scmp.eq.s32.totalorder %s29, 0
      %p258 = por %p256, %p257
      %p259 = scmp.le.s32.totalorder 1, %s23
      %p260 = scmp.lt.s32.totalorder %s23, 3
      %p261 = pnand %p259, %p260
      %p262 = pneg %p261
      // Predicated region
      $region9: #{tpu_custom_call.1} parent=5 // pred_check
        _
      $region10: #{tpu_custom_call.1} parent=5 // pred_check_branch
        %264 = sbr.rel (%p261) target = $region12
      $region11: #{tpu_custom_call.1} parent=5 // pred_region
        %s265 = ssub.s32 %s23, 1
        // Predicated region
        $region13: #{tpu_custom_call.1} parent=11 // pred_check
          %p266 = pneg %p120
        $region14: #{tpu_custom_call.1} parent=11 // pred_check_branch
          %268 = sbr.rel (%p266) target = $region16
        $region15: #{tpu_custom_call.1} parent=11 // pred_region
          _
        $region16: #{tpu_custom_call.1} parent=11 // pred_fallthru
          _
        // Predicated region
        $region17: #{tpu_custom_call.1} parent=11 // pred_check
          %p269 = pneg %p141
        $region18: #{tpu_custom_call.1} parent=11 // pred_check_branch
          %271 = sbr.rel (%p269) target = $region20
        $region19: #{tpu_custom_call.1} parent=11 // pred_region
          _
        $region20: #{tpu_custom_call.1} parent=11 // pred_fallthru
          _
        // Predicated region
        $region21: #{tpu_custom_call.1} parent=11 // pred_check
          %p272 = pneg %p162
        $region22: #{tpu_custom_call.1} parent=11 // pred_check_branch
          %274 = sbr.rel (%p272) target = $region24
        $region23: #{tpu_custom_call.1} parent=11 // pred_region
          _
        $region24: #{tpu_custom_call.1} parent=11 // pred_fallthru
          _
        // Predicated region
        $region25: #{tpu_custom_call.1} parent=11 // pred_check
          %p275 = pneg %p183
        $region26: #{tpu_custom_call.1} parent=11 // pred_check_branch
          %277 = sbr.rel (%p275) target = $region28
        $region27: #{tpu_custom_call.1} parent=11 // pred_region
          _
        $region28: #{tpu_custom_call.1} parent=11 // pred_fallthru
          _
        // Predicated region
        $region29: #{tpu_custom_call.1} parent=11 // pred_check
          %p278 = pneg %p204
        $region30: #{tpu_custom_call.1} parent=11 // pred_check_branch
          %280 = sbr.rel (%p278) target = $region32
        $region31: #{tpu_custom_call.1} parent=11 // pred_region
          _
        $region32: #{tpu_custom_call.1} parent=11 // pred_fallthru
          _
        // Predicated region
        $region33: #{tpu_custom_call.1} parent=11 // pred_check
          %p281 = pneg %p225
        $region34: #{tpu_custom_call.1} parent=11 // pred_check_branch
          %283 = sbr.rel (%p281) target = $region36
        $region35: #{tpu_custom_call.1} parent=11 // pred_region
          _
        $region36: #{tpu_custom_call.1} parent=11 // pred_fallthru
          _
      $region12: #{tpu_custom_call.1} parent=5 // pred_fallthru
        _
      %p284 = scmp.lt.s32.totalorder %s23, 2
      // Predicated region
      $region37: #{tpu_custom_call.1} parent=5 // pred_check
        %p285 = pneg %p284
      $region38: #{tpu_custom_call.1} parent=5 // pred_check_branch
        %287 = sbr.rel (%p285) target = $region40
      $region39: #{tpu_custom_call.1} parent=5 // pred_region
        // Predicated region
        $region41: #{tpu_custom_call.1} parent=39 // pred_check
          %p288 = pneg %p61
        $region42: #{tpu_custom_call.1} parent=39 // pred_check_branch
          %290 = sbr.rel (%p288) target = $region44
        $region43: #{tpu_custom_call.1} parent=39 // pred_region
          %s291 = sand.u32 %s51, 1
          %s292 = scalar_lea.sflag [#allocation4], %s291
          %s293 = sand.u32 %s51, 1
          %s294 = smul.addr %s293, 16
          %s295 = scalar_lea.vmem [#allocation3], %s294
          %s296 = sadd.s32 %s30, %s31
          %p297 = scmp.lt.s32.totalorder %s296, 0
          %s298 = scalar_select %p297, %s296, 0
          %s299 = smul.u32 2, %s298
          %s301 = ssub.s32 256, 256
          %302 = vsyncadd %s292, %s301
          %s303 = smul.addr %s299, 128
          %s304 = scalar_lea.hbm %s0, %s303
          %s305 = sshll.u32 %s295, 4
          %s306 = int_to_ptr.vmem [resolvable:$true] %s305
          %311 = dma.hbm_to_vmem [thread:$0]  %s304, 256, %s306, %s292, 128, 128, 8
        $region44: #{tpu_custom_call.1} parent=39 // pred_fallthru
          _
        // Predicated region
        $region45: #{tpu_custom_call.1} parent=39 // pred_check
          %p312 = pneg %p93
        $region46: #{tpu_custom_call.1} parent=39 // pred_check_branch
          %314 = sbr.rel (%p312) target = $region48
        $region47: #{tpu_custom_call.1} parent=39 // pred_region
          %s315 = sand.u32 %s83, 1
          %s316 = scalar_lea.sflag [#allocation7], %s315
          %s317 = sand.u32 %s83, 1
          %s318 = smul.addr %s317, 16
          %s319 = scalar_lea.vmem [#allocation6], %s318
          %s320 = sadd.s32 %s30, %s31
          %p321 = scmp.lt.s32.totalorder %s320, 0
          %s322 = scalar_select %p321, %s320, 0
          %s323 = smul.u32 2, %s322
          %s325 = ssub.s32 256, 256
          %326 = vsyncadd %s316, %s325
          %s327 = smul.addr %s323, 128
          %s328 = scalar_lea.hbm %s1, %s327
          %s329 = sshll.u32 %s319, 4
          %s330 = int_to_ptr.vmem [resolvable:$true] %s329
          %335 = dma.hbm_to_vmem [thread:$0]  %s328, 256, %s330, %s316, 128, 128, 8
        $region48: #{tpu_custom_call.1} parent=39 // pred_fallthru
          _
      $region40: #{tpu_custom_call.1} parent=5 // pred_fallthru
        _
      %p336 = scmp.le.s32.totalorder 1, %s23
      %p337 = scmp.lt.s32.totalorder %s23, 3
      %p338 = pnand %p336, %p337
      %p339 = pneg %p338
      // Predicated region
      $region49: #{tpu_custom_call.1} parent=5 // pred_check
        _
      $region50: #{tpu_custom_call.1} parent=5 // pred_check_branch
        %341 = sbr.rel (%p338) target = $region52
      $region51: #{tpu_custom_call.1} parent=5 // pred_region
        %s342 = ssub.s32 %s23, 1
        %s343 = sand.u32 %s54, 1
        %s344 = scalar_lea.sflag [#allocation4], %s343
        %s345 = sand.u32 %s54, 1
        %s346 = smul.addr %s345, 16
        %s347 = scalar_lea.vmem [#allocation3], %s346
        // Predicated region
        $region53: #{tpu_custom_call.1} parent=51 // pred_check
          %p348 = pneg %p67
        $region54: #{tpu_custom_call.1} parent=51 // pred_check_branch
          %350 = sbr.rel (%p348) target = $region56
        $region55: #{tpu_custom_call.1} parent=51 // pred_region
          %351 = dma.done %s344, 256
        $region56: #{tpu_custom_call.1} parent=51 // pred_fallthru
          _
        %s352 = sand.u32 %s86, 1
        %s353 = scalar_lea.sflag [#allocation7], %s352
        %s354 = sand.u32 %s86, 1
        %s355 = smul.addr %s354, 16
        %s356 = scalar_lea.vmem [#allocation6], %s355
        // Predicated region
        $region57: #{tpu_custom_call.1} parent=51 // pred_check
          %p357 = pneg %p99
        $region58: #{tpu_custom_call.1} parent=51 // pred_check_branch
          %359 = sbr.rel (%p357) target = $region60
        $region59: #{tpu_custom_call.1} parent=51 // pred_region
          %360 = dma.done %s353, 256
        $region60: #{tpu_custom_call.1} parent=51 // pred_fallthru
          _
        %s361 = sand.u32 %s54, 1
        %s362 = scalar_lea.sflag [#allocation4], %s361
        %s363 = sand.u32 %s54, 1
        %s364 = smul.addr %s363, 16
        %s365 = scalar_lea.vmem [#allocation3], %s364
        %p366 = pneg %p67
        %p367 = pneg %p64
        %s368 = sand.u32 %s86, 1
        %s369 = scalar_lea.sflag [#allocation7], %s368
        %s370 = sand.u32 %s86, 1
        %s371 = smul.addr %s370, 16
        %s372 = scalar_lea.vmem [#allocation6], %s371
        %p373 = pneg %p99
        %p374 = pneg %p96
        %p375 = pneg %p120
        %p376 = pneg %p117
        %p377 = pneg %p141
        %p378 = pneg %p138
        %p379 = pneg %p162
        %p380 = pneg %p159
        %p381 = pneg %p183
        %p382 = pneg %p180
        %p383 = pneg %p204
        %p384 = pneg %p201
        %p385 = pneg %p225
        %p386 = pneg %p222
        %p387 = pneg %p251
        %p388 = pneg %p248
        %s389 = sand.u32 %s238, 1
        %s390 = scalar_lea.sflag [#allocation5], %s389
        %s391 = sand.u32 %s238, 1
        %s392 = smul.addr %s391, 8
        %s393 = scalar_lea.vmem [#allocation8], %s392
        %s394 = sadd.s32 %s32, %s33
        %p395 = scmp.lt.s32.totalorder %s394, 0
        %s396 = scalar_select %p395, %s394, 0
        %s397 = smul.u32 2, %s396
        %s398 = sadd.s32 %s32, %s33
        %p399 = scmp.lt.s32.totalorder %s398, 0
        %s400 = scalar_select %p399, %s398, 0
        %s401 = smul.u32 2, %s400
        %p402 = scmp.eq.s32.totalorder %s33, 0
        // Predicated region
        $region61: #{tpu_custom_call.1} parent=51 // pred_check
          %p403 = pneg %p402
        $region62: #{tpu_custom_call.1} parent=51 // pred_check_branch
          %405 = sbr.rel (%p403) target = $region64
        $region63: #{tpu_custom_call.1} parent=51 // pred_region
          %406 = vst [vmem:[#allocation2] sm:$0xff] 0.0
        $region64: #{tpu_custom_call.1} parent=51 // pred_fallthru
          _
        %s407 = sadd.s32 %s32, %s33
        %s408 = smul.u32 %s407, 16
        %v409 = vlaneseq
        %v410 = vshrl.u32 %v409, 7
        %v411 = vadd.s32 %v410, 8
        %v412 = vld [vmem:[%s347] sm:$0xff]
        %v413 = vld [vmem:[%s347 + $0x8] sm:$0xff]
        %v414 = vld [vmem:[%s356] sm:$0xff]
        %v415 = vld [vmem:[%s356 + $0x8] sm:$0xff]
        %v416 = vsub.f32 %v412, %v414
        %v417 = vsub.f32 %v413, %v415
        %v418 = vstv %s408
        %v419 = vadd.s32 %v418, %v410
        %v420 = vadd.s32 %v418, %v411
        %vm421 = vcmp.lt.s32.totalorder %v419, 16
        %vm422 = vcmp.lt.s32.totalorder %v420, 16
        %v423 = vsel %vm421, %v416, 0.0
        %v424 = vsel %vm422, %v417, 0.0
        %v425 = vmul.f32 %v423, %v423
        %v426 = vmul.f32 %v424, %v424
        %v427 = vld [vmem:[#allocation2] sm:$0xff]
        %v428 = vadd.f32 %v425, %v426
        %v429 = vadd.f32 %v427, %v428
        %430 = vst [vmem:[#allocation2] sm:$0xff] %v429
        // Predicated region
        $region65: #{tpu_custom_call.1} parent=51 // pred_check
          %p431 = pneg %p402
        $region66: #{tpu_custom_call.1} parent=51 // pred_check_branch
          %433 = sbr.rel (%p431) target = $region68
        $region67: #{tpu_custom_call.1} parent=51 // pred_region
          %v434 = vld [vmem:[#allocation2] sm:$0xff]
          %435 = vadd.xlane.f32.xlu0 %v434
          %v436 = vpop.xlane.xlu0 %435
          %v437 = vrot.slane %v436, 4
          %v438 = vadd.f32 %v436, %v437
          %v439 = vrot.slane %v438, 2
          %v440 = vadd.f32 %v438, %v439
          %v441 = vrot.slane %v440, 1
          %v442 = vadd.f32 %v440, %v441
          %s443 = vtos %v442
          %v444 = vstv %s443
          %v445 = vmul.f32 %v444, 0.00048828125
          %p446 = scmp.eq.s32.totalorder %s32, 0
          // Predicated region
          $region69: #{tpu_custom_call.1} parent=67 // pred_check
            %p447 = pneg %p446
          $region70: #{tpu_custom_call.1} parent=67 // pred_check_branch
            %449 = sbr.rel (%p447) target = $region72
          $region71: #{tpu_custom_call.1} parent=67 // pred_region
            %v450 = vld [vmem:[%s4] sm:$0x1]
            %v451 = vld [vmem:[%s6] sm:$0x1]
            %v452 = vsub.f32 %v450, %v451
            %v453 = vand.u32 2147483647, %v452
            %v454 = vrcp.pop 360.0
            %v455 = vmul.f32 %v453, %v454
            %v456 = vfloor.f32 %v455
            %v457 = vmul.f32 %v456, 360.0
            %v458 = vsub.f32 %v453, %v457
            %vm459 = vcmp.eq.f32.partialorder %v458, 360.0
            %v460 = vsel %vm459, 0.0, %v458
            %v461 = vand.u32 2147483647, %v460
            %v462 = vand.u32 %v452, 2147483648
            %v463 = vor.u32 %v461, %v462
            %vm464 = vcmp.ne.f32.partialorder %v463, 0.0
            %vm465 = vcmp.lt.f32.partialorder %v463, 0.0
            %vm466 = vmand %vm465, %vm464
            %v467 = vadd.f32 %v463, 360.0
            %v468 = vsel %vm466, %v467, %v463
            %v469 = vsub.f32 360.0, %v468
            %v470 = vmin.f32 %v468, %v469
            %v471 = vmul.f32 %v470, 0.0027777778
            %v472 = vmul.f32 %v471, %v471
            %vm473 = vcmask 8192
            %v474 = vsel %vm473, %v472, 0.0
            %475 = vadd.xlane.f32.xlu0 %v474
            %v476 = vpop.xlane.xlu0 %475
            %v477 = vrot.slane %v476, 4
            %v478 = vadd.f32 %v476, %v477
            %v479 = vrot.slane %v478, 2
            %v480 = vadd.f32 %v478, %v479
            %v481 = vrot.slane %v480, 1
            %v482 = vadd.f32 %v480, %v481
            %s483 = vtos %v482
            %v484 = vstv %s483
            %v485 = vrcp.pop 2.0
            %v486 = vmul.f32 %v484, %v485
            %v487 = vld [vmem:[%s5] sm:$0x1]
            %v488 = vld [vmem:[%s7] sm:$0x1]
            %v489 = vmul.f32 %v487, 0.0055555557
            %v490 = vmul.f32 %v488, 0.0055555557
            %v491 = vsub.f32 %v489, %v490
            %v492 = vmul.f32 %v491, %v491
            %v493 = vsel %vm473, %v492, 0.0
            %494 = vadd.xlane.f32.xlu0 %v493
            %v495 = vpop.xlane.xlu0 %494
            %v496 = vrot.slane %v495, 4
            %v497 = vadd.f32 %v495, %v496
            %v498 = vrot.slane %v497, 2
            %v499 = vadd.f32 %v497, %v498
            %v500 = vrot.slane %v499, 1
            %v501 = vadd.f32 %v499, %v500
            %s502 = vtos %v501
            %v503 = vstv %s502
            %v504 = vmul.f32 %v503, %v485
            %v505 = vadd.f32 %v486, %v504
            %v506 = vmul.f32 %v505, 0.25
            %v507 = vld [vmem:[%s3] sm:$0x1]
            %v508 = vmax.f32 %v507, -20.0
            %v509 = vmin.f32 %v508, 20.0
            %v510 = vmul.f32 %v509, 1.442695
            %v511 = vpow.pop %v510
            %v512 = vadd.f32 %v511, 1.1920929e-07
            %v513 = vld [vmem:[%s2] sm:$0x1]
            %v514 = vadd.f32 %v509, 1.0
            %v515 = vmul.f32 %v513, %v513
            %v516 = vsub.f32 %v514, %v515
            %v517 = vsub.f32 %v516, %v512
            %vm518 = vcmask 516096
            %v519 = vsel %vm518, %v517, 0.0
            %520 = vadd.xlane.f32.xlu0 %v519
            %v521 = vpop.xlane.xlu0 %520
            %v522 = vrot.slane %v521, 4
            %v523 = vadd.f32 %v521, %v522
            %v524 = vrot.slane %v523, 2
            %v525 = vadd.f32 %v523, %v524
            %v526 = vrot.slane %v525, 1
            %v527 = vadd.f32 %v525, %v526
            %s528 = vtos %v527
            %v529 = vstv %s528
            %v530 = vrcp.pop 64.0
            %v531 = vmul.f32 %v529, %v530
            %v532 = vmul.f32 %v531, -0.5
            %v533 = vadd.f32 %v445, %v506
            %v534 = vmul.f32 %v532, 0.25
            %v535 = vadd.f32 %v533, %v534
            %536 = vst [vmem:[%s393] sm:$0xff] %v535
          $region72: #{tpu_custom_call.1} parent=67 // pred_fallthru
            _
          %p537 = scmp.ne.s32.totalorder %s32, 0
          // Predicated region
          $region73: #{tpu_custom_call.1} parent=67 // pred_check
            %p538 = pneg %p537
          $region74: #{tpu_custom_call.1} parent=67 // pred_check_branch
            %540 = sbr.rel (%p538) target = $region76
          $region75: #{tpu_custom_call.1} parent=67 // pred_region
            %541 = vst [vmem:[%s393] sm:$0xff] %v445
          $region76: #{tpu_custom_call.1} parent=67 // pred_fallthru
            _
        $region68: #{tpu_custom_call.1} parent=51 // pred_fallthru
          _
        %s542 = sand.u32 %s238, 1
        %s543 = scalar_lea.sflag [#allocation5], %s542
        %s544 = sand.u32 %s238, 1
        %s545 = smul.addr %s544, 8
        %s546 = scalar_lea.vmem [#allocation8], %s545
        // Predicated region
        $region77: #{tpu_custom_call.1} parent=51 // pred_check
          %p547 = pneg %p248
        $region78: #{tpu_custom_call.1} parent=51 // pred_check_branch
          %549 = sbr.rel (%p547) target = $region80
        $region79: #{tpu_custom_call.1} parent=51 // pred_region
          %s551 = ssub.s32 128, 128
          %552 = vsyncadd %s543, %s551
          %s553 = smul.addr %s32, 128
          %s554 = scalar_lea.hbm %s8, %s553
          %s556 = sshll.u32 %s546, 4
          %s557 = int_to_ptr.vmem [resolvable:$true] %s556
          %559 = dma.vmem_to_hbm [thread:$0]  %s557, 128, %s554, %s543
        $region80: #{tpu_custom_call.1} parent=51 // pred_fallthru
          _
      $region52: #{tpu_custom_call.1} parent=5 // pred_fallthru
        _
      %p560 = scmp.le.s32.totalorder 2, %s23
      // Predicated region
      $region81: #{tpu_custom_call.1} parent=5 // pred_check
        %p561 = pneg %p560
      $region82: #{tpu_custom_call.1} parent=5 // pred_check_branch
        %563 = sbr.rel (%p561) target = $region84
      $region83: #{tpu_custom_call.1} parent=5 // pred_region
        %s564 = ssub.s32 %s23, 2
        // Predicated region
        $region85: #{tpu_custom_call.1} parent=83 // pred_check
          %p565 = pneg %p254
        $region86: #{tpu_custom_call.1} parent=83 // pred_check_branch
          %567 = sbr.rel (%p565) target = $region88
        $region87: #{tpu_custom_call.1} parent=83 // pred_region
          %s568 = sand.u32 %s239, 1
          %s569 = scalar_lea.sflag [#allocation5], %s568
          %s570 = sand.u32 %s239, 1
          %s571 = smul.addr %s570, 8
          %s572 = scalar_lea.vmem [#allocation8], %s571
          %573 = dma.done %s569, 128
        $region88: #{tpu_custom_call.1} parent=83 // pred_fallthru
          _
      $region84: #{tpu_custom_call.1} parent=5 // pred_fallthru
        _
    $region6: #{tpu_custom_call.1} parent=1 // loop_footer
      %s27 = sadd.s32 1, %s23
    $region7: #{tpu_custom_call.1} parent=1 // loop_footer_branch
      %22 = sbr.rel target = $region3
    $region8: #{tpu_custom_call.1} parent=1 // loop_exit
      _
    %574 = vsyncpa [#allocation4], 1
    %s575 = scalar_lea.sflag [#allocation4], 1
    %576 = vsyncpa %s575, 1
    %577 = vsyncpa [#allocation7], 1
    %s578 = scalar_lea.sflag [#allocation7], 1
    %579 = vsyncpa %s578, 1
    %580 = vsyncpa [#allocation5], 1
    %s581 = scalar_lea.sflag [#allocation5], 1
    %582 = vsyncpa %s581, 1

</llo_original>
